<compile_context>
chip_gen: v7x
topology: tpu7x:2x2x1
jax: 0.10.0
libtpu: 0.0.40
codegen_flags: <defaults>
</compile_context>

<pallas_src>
import functools

import jax
import jax.numpy as jnp
from jax.experimental import pallas as pl
from jax.experimental.pallas import tpu as pltpu


def slstm_seq_kernel(x_ref, wr_ref, b_ref, s0_ref, out_ref, state_scr, *, hidden):
    """One grid step == one timestep of the sLSTM recurrence.

    x_ref   : [B, I]        current timestep input (squeezed T block)
    wr_ref  : [I+H, 4H]     fused (W; R) weights, VMEM-resident across steps
    b_ref   : [1, 4H]       fused bias, VMEM-resident
    s0_ref  : [B, 4H]       initial fused state (h|c|n|m), VMEM-resident
    out_ref : [B, 4H]       fused state written for this timestep
    state_scr: [B, 4H]      VMEM scratch carrying the state across grid steps
    """
    H = hidden
    t = pl.program_id(0)

    @pl.when(t == 0)
    def _():
        state_scr[...] = s0_ref[...]

    state = state_scr[...]
    h_prev = state[:, 0 * H:1 * H]
    c_prev = state[:, 1 * H:2 * H]
    n_prev = state[:, 2 * H:3 * H]
    m_prev = state[:, 3 * H:4 * H]

    # One fused MXU matmul: [B, I+H] @ [I+H, 4H] -> [B, 4H] (lane-dense).
    xh = jnp.concatenate([x_ref[...], h_prev], axis=-1).astype(wr_ref.dtype)
    gates = (jnp.dot(xh, wr_ref[...], preferred_element_type=jnp.float32)
             + b_ref[...])

    i_tilda = gates[:, 0 * H:1 * H]
    f_tilda = gates[:, 1 * H:2 * H]
    o_tilda = gates[:, 2 * H:3 * H]
    z_tilda = gates[:, 3 * H:4 * H]

    # Exponential gating with stabilizer m (mathematically identical to the
    # torch code, without the log(exp(.)) / log(sigmoid(.)) round trips):
    #   log(i_t) = i_tilda
    #   log(f_t) = log(sigmoid(f_tilda)) = min(f,0) - log1p(exp(-|f|))
    log_i = i_tilda
    log_f = jnp.minimum(f_tilda, 0.0) - jnp.log1p(jnp.exp(-jnp.abs(f_tilda)))

    m_t = jnp.maximum(log_f + m_prev, log_i)
    i_prime = jnp.exp(log_i - m_t)
    f_prime = jnp.exp(log_f + m_prev - m_t)

    c_t = f_prime * c_prev + i_prime * jnp.tanh(z_tilda)
    n_t = f_prime * n_prev + i_prime
    c_hat = c_t / n_t                      # exact division (n_t can be tiny)
    h_t = jax.nn.sigmoid(o_tilda) * jnp.tanh(c_hat)

    # TODO(synk): while H < 128 the transcendentals above run on quarter-vreg
    # slices; lane-band packing of the exp/tanh args would cut EUP pushes but
    # the data dependencies (softplus -> m_t -> exps -> tanh(c_hat)) make the
    # gain marginal, and it becomes moot for H >= 128.
    new_state = jnp.concatenate([h_t, c_t, n_t, m_t], axis=-1)
    state_scr[...] = new_state
    out_ref[...] = new_state


def prep_params(params, matmul_dtype=jnp.float32):
    """One-time layout prep: torch-layout params -> fused, kernel-ready operands.

    w_* : [H, I], r_* : [H, H], b_* : [H]  ->
      WR_cat : [I+H, 4H]  (vstack of transposed, per-gate-concatenated W and R)
      b_cat  : [1, 4H]
    concat([x, h]) @ WR_cat equals the concatenation over gates g of
    (w_g @ x.T).T + (r_g @ h.T).T.
    Use matmul_dtype=jnp.bfloat16 on v6e/v7x for the MXU inputs; gate math
    stays fp32 inside the kernel regardless.
    """
    H = params["w_i"].shape[0]
    w_cat = jnp.concatenate(
        [params[k].T for k in ("w_i", "w_f", "w_o", "w_z")], axis=1)     # [I, 4H]
    r_cat = jnp.concatenate(
        [params[k].T for k in ("r_i", "r_f", "r_o", "r_z")], axis=1)     # [H, 4H]
    wr_cat = jnp.concatenate([w_cat, r_cat], axis=0).astype(matmul_dtype)
    b_cat = jnp.concatenate(
        [params[k] for k in ("b_i", "b_f", "b_o", "b_z")], axis=0
    ).reshape(1, 4 * H).astype(jnp.float32)
    return {"wr_cat": wr_cat, "b_cat": b_cat}


def slstm_sequence(x_seq, states, prepped):
    """Run the sLSTM cell over a whole sequence inside a single pallas_call.

    x_seq : [T, B, input_size]
    states: (h, c, n, m) each [B, hidden]  (initial state)
    Returns (h_seq [T, B, hidden], (h_T, c_T, n_T, m_T)).
    """
    h0, c0, n0, m0 = states
    T, B, I = x_seq.shape
    H = h0.shape[1]
    wr = prepped["wr_cat"]
    b = prepped["b_cat"]
    s0 = jnp.concatenate([h0, c0, n0, m0], axis=-1)            # [B, 4H]

    flops = 2 * T * B * (I + H) * 4 * H + 25 * T * B * 4 * H
    transcendentals = 6 * T * B * H
    bytes_accessed = (x_seq.size * x_seq.dtype.itemsize
                      + wr.size * wr.dtype.itemsize
                      + b.size * 4 + s0.size * 4
                      + T * B * 4 * H * 4)

    out = pl.pallas_call(
        functools.partial(slstm_seq_kernel, hidden=H),
        out_shape=jax.ShapeDtypeStruct((T, B, 4 * H), jnp.float32),
        grid_spec=pltpu.PrefetchScalarGridSpec(
            num_scalar_prefetch=0,
            grid=(T,),
            in_specs=[
                pl.BlockSpec((None, B, I), lambda t: (t, 0, 0)),     # x_t per step
                pl.BlockSpec((I + H, 4 * H), lambda t: (0, 0)),      # WR resident
                pl.BlockSpec((1, 4 * H), lambda t: (0, 0)),          # bias resident
                pl.BlockSpec((B, 4 * H), lambda t: (0, 0)),          # s0 resident
            ],
            out_specs=pl.BlockSpec((None, B, 4 * H), lambda t: (t, 0, 0)),
            scratch_shapes=[pltpu.VMEM((B, 4 * H), jnp.float32)],
        ),
        compiler_params=pltpu.CompilerParams(
            dimension_semantics=("arbitrary",),        # sequential recurrence over T
            vmem_limit_bytes=32 * 1024 * 1024,
        ),
        cost_estimate=pl.CostEstimate(
            flops=int(flops),
            transcendentals=int(transcendentals),
            bytes_accessed=int(bytes_accessed),
        ),
    )(x_seq, wr, b, s0)

    h_seq = out[:, :, 0:H]
    final = out[-1]
    h_T = final[:, 0 * H:1 * H]
    c_T = final[:, 1 * H:2 * H]
    n_T = final[:, 2 * H:3 * H]
    m_T = final[:, 3 * H:4 * H]
    return h_seq, (h_T, c_T, n_T, m_T)


def slstm_cell(x, states, prepped):
    """Single-step API matching the torch module: x [B, I], states 4x[B, H].

    Returns (h_t, (h_t, c_t, n_t, m_t)) exactly like sLSTMCell.forward.
    """
    h_seq, final = slstm_sequence(x[None], states, prepped)
    return h_seq[0], final


def slstm_cell_ref(x, states, params):
    """Pure-JAX literal transcription of the torch forward (for verification)."""
    h_prev, c_prev, n_prev, m_prev = states

    def lin(w, r, b):
        return x @ w.T + h_prev @ r.T + b

    i_tilda = lin(params["w_i"], params["r_i"], params["b_i"])
    f_tilda = lin(params["w_f"], params["r_f"], params["b_f"])
    o_tilda = lin(params["w_o"], params["r_o"], params["b_o"])
    z_tilda = lin(params["w_z"], params["r_z"], params["b_z"])

    i_t = jnp.exp(i_tilda)
    f_t = jax.nn.sigmoid(f_tilda)
    m_t = jnp.maximum(jnp.log(f_t) + m_prev, jnp.log(i_t))
    i_prime = jnp.exp(jnp.log(i_t) - m_t)
    f_prime = jnp.exp(jnp.log(f_t) + m_prev - m_t)
    c_t = f_prime * c_prev + i_prime * jnp.tanh(z_tilda)
    n_t = f_prime * n_prev + i_prime
    c_hat = c_t / n_t
    h_t = jax.nn.sigmoid(o_tilda) * jnp.tanh(c_hat)
    return h_t, (h_t, c_t, n_t, m_t)


def init_params(key, input_size, hidden_size):
    """Deterministic synthetic init mirroring reset_parameters() shapes."""
    keys = jax.random.split(key, 8)

    def xavier(k, shape):
        fan_out, fan_in = shape
        limit = jnp.sqrt(6.0 / (fan_in + fan_out))
        return jax.random.uniform(k, shape, jnp.float32, -limit, limit)

    def orthogonal(k, n):
        a = jax.random.normal(k, (n, n), jnp.float32)
        q, r = jnp.linalg.qr(a)
        return q * jnp.sign(jnp.diag(r))[None, :]

    params = {
        "w_i": xavier(keys[0], (hidden_size, input_size)),
        "w_f": xavier(keys[1], (hidden_size, input_size)),
        "w_o": xavier(keys[2], (hidden_size, input_size)),
        "w_z": xavier(keys[3], (hidden_size, input_size)),
        "r_i": orthogonal(keys[4], hidden_size),
        "r_f": orthogonal(keys[5], hidden_size),
        "r_o": orthogonal(keys[6], hidden_size),
        "r_z": orthogonal(keys[7], hidden_size),
        "b_i": jnp.zeros((hidden_size,), jnp.float32),
        "b_f": jnp.zeros((hidden_size,), jnp.float32),
        "b_o": jnp.zeros((hidden_size,), jnp.float32),
        "b_z": jnp.zeros((hidden_size,), jnp.float32),
    }
    # TODO(synk): self.linear (hidden_size -> 1) is defined in __init__ but never
    # used in sLSTMCell.forward, so it is intentionally not implemented here.
    return params


if __name__ == "__main__":
    T, B, INPUT, HIDDEN = 8, 8, 16, 32   # 4*HIDDEN = 128 -> lane-dense fused gates

    key = jax.random.PRNGKey(0)
    k_params, k_x = jax.random.split(key)

    params = init_params(k_params, INPUT, HIDDEN)
    prepped = prep_params(params)                        # fp32 matmul inputs here;
    # use prep_params(params, jnp.bfloat16) on v6e/v7x for bf16 MXU inputs.

    x_seq = jax.random.normal(k_x, (T, B, INPUT), jnp.float32)

    # initial states (zeros, like the surrounding qlib model would provide)
    h0 = jnp.zeros((B, HIDDEN), jnp.float32)
    c0 = jnp.zeros((B, HIDDEN), jnp.float32)
    n0 = jnp.zeros((B, HIDDEN), jnp.float32)
    m0 = jnp.zeros((B, HIDDEN), jnp.float32)
    states0 = (h0, c0, n0, m0)

    # Full sequence in ONE pallas_call (time loop inside the kernel).
    h_seq, (h_T, c_T, n_T, m_T) = slstm_sequence(x_seq, states0, prepped)
    jax.block_until_ready((h_seq, h_T, c_T, n_T, m_T))

    assert h_seq.shape == (T, B, HIDDEN)
    assert h_T.shape == (B, HIDDEN) and c_T.shape == (B, HIDDEN)
    assert n_T.shape == (B, HIDDEN) and m_T.shape == (B, HIDDEN)
    assert bool(jnp.all(jnp.isfinite(h_seq)))

    # Verify against a literal pure-JAX transcription of the torch forward,
    # stepped over the same sequence.
    st = states0
    ref_h = []
    for t in range(T):
        h_r, st = slstm_cell_ref(x_seq[t], st, params)
        ref_h.append(h_r)
    ref_h = jnp.stack(ref_h, axis=0)
    h_r_T, c_r_T, n_r_T, m_r_T = st

    assert bool(jnp.allclose(h_seq, ref_h, rtol=1e-2, atol=1e-2)), "h_seq mismatch"
    for a, b in ((h_T, h_r_T), (c_T, c_r_T), (n_T, n_r_T), (m_T, m_r_T)):
        assert bool(jnp.allclose(a, b, rtol=1e-2, atol=1e-2)), "final state mismatch"

    # Single-step API (matches torch sLSTMCell.forward signature) still works.
    h1, (h1b, c1, n1, m1) = slstm_cell(x_seq[0], states0, prepped)
    jax.block_until_ready(h1)
    h1_ref, _ = slstm_cell_ref(x_seq[0], states0, params)
    assert bool(jnp.allclose(h1, h1_ref, rtol=1e-2, atol=1e-2)), "single-step mismatch"

    print("KERNEL_OK")
</pallas_src>

<mosaic_0001>
module attributes {stable_mosaic.version = 11 : i64} {
  func.func @slstm_seq_kernel(%arg0: i32, %arg1: memref<1x8x16xf32, #tpu.memory_space<vmem>>, %arg2: memref<48x128xf32, #tpu.memory_space<vmem>>, %arg3: memref<1x128xf32, #tpu.memory_space<vmem>>, %arg4: memref<8x128xf32, #tpu.memory_space<vmem>>, %arg5: memref<1x8x128xf32, #tpu.memory_space<vmem>>, %arg6: memref<8x128xf32, #tpu.memory_space<vmem>>) attributes {dimension_semantics = [#tpu.dimension_semantics<arbitrary>], iteration_bounds = array<i64: 8>, scalar_prefetch = 0 : i64, scratch_operands = 1 : i64, tpu.core_type = #tpu.core_type<tc>, window_params = [{transform_indices = @transform_0, window_bounds = array<i64: 1, 8, 16>}, {pipeline_mode = #tpu.pipeline_mode<synchronous>, transform_indices = @transform_1, window_bounds = array<i64: 48, 128>}, {pipeline_mode = #tpu.pipeline_mode<synchronous>, transform_indices = @transform_2, window_bounds = array<i64: 1, 128>}, {pipeline_mode = #tpu.pipeline_mode<synchronous>, transform_indices = @transform_3, window_bounds = array<i64: 8, 128>}, {transform_indices = @transform_4, window_bounds = array<i64: 1, 8, 128>}]} {
    %c0_i32 = arith.constant 0 : i32
    %0 = arith.cmpi eq, %arg0, %c0_i32 : i32
    %1 = arith.extui %0 : i1 to i32
    %c0_i32_0 = arith.constant 0 : i32
    %2 = arith.cmpi ne, %1, %c0_i32_0 : i32
    scf.if %2 {
      %c0_17 = arith.constant 0 : index
      %c0_18 = arith.constant 0 : index
      %54 = vector.load %arg4[%c0_17, %c0_18] : memref<8x128xf32, #tpu.memory_space<vmem>>, vector<8x128xf32>
      %c0_19 = arith.constant 0 : index
      %c0_20 = arith.constant 0 : index
      %55 = vector.load %arg6[%c0_19, %c0_20] : memref<8x128xf32, #tpu.memory_space<vmem>>, vector<8x128xf32>
      tpu.vector_store %arg6[%c0_19, %c0_20], %54 {strides = array<i32>} : memref<8x128xf32, #tpu.memory_space<vmem>>, vector<8x128xf32>,
    } else {
    }
    %c0 = arith.constant 0 : index
    %c0_1 = arith.constant 0 : index
    %3 = vector.load %arg6[%c0, %c0_1] : memref<8x128xf32, #tpu.memory_space<vmem>>, vector<8x128xf32>
    %4 = vector.extract_strided_slice %3 {offsets = [0, 0], sizes = [8, 32], strides = [1, 1]} : vector<8x128xf32> to vector<8x32xf32>
    %5 = vector.extract_strided_slice %3 {offsets = [0, 32], sizes = [8, 32], strides = [1, 1]} : vector<8x128xf32> to vector<8x32xf32>
    %6 = vector.extract_strided_slice %3 {offsets = [0, 64], sizes = [8, 32], strides = [1, 1]} : vector<8x128xf32> to vector<8x32xf32>
    %7 = vector.extract_strided_slice %3 {offsets = [0, 96], sizes = [8, 32], strides = [1, 1]} : vector<8x128xf32> to vector<8x32xf32>
    %c0_2 = arith.constant 0 : index
    %c0_3 = arith.constant 0 : index
    %c0_4 = arith.constant 0 : index
    %8 = vector.load %arg1[%c0_2, %c0_3, %c0_4] : memref<1x8x16xf32, #tpu.memory_space<vmem>>, vector<1x8x16xf32>
    %9 = vector.shape_cast %8 : vector<1x8x16xf32> to vector<8x16xf32>
    %10 = tpu.concatenate %9, %4 in 1 : vector<8x16xf32>, vector<8x32xf32> -> vector<8x48xf32>
    %c0_5 = arith.constant 0 : index
    %c0_6 = arith.constant 0 : index
    %11 = vector.load %arg2[%c0_5, %c0_6] : memref<48x128xf32, #tpu.memory_space<vmem>>, vector<48x128xf32>
    %cst = arith.constant dense<0.000000e+00> : vector<8x128xf32>
    %12 = tpu.matmul %10, %11, %cst {dimension_numbers = #tpu.dot_dimension_numbers<[1], [0], [0], [1], [0, 0, 1, 1], [], []>} : vector<8x48xf32>, vector<48x128xf32>, vector<8x128xf32> -> vector<8x128xf32>
    %c0_7 = arith.constant 0 : index
    %c0_8 = arith.constant 0 : index
    %13 = vector.load %arg3[%c0_7, %c0_8] : memref<1x128xf32, #tpu.memory_space<vmem>>, vector<1x128xf32>
    %14 = vector.broadcast %13 : vector<1x128xf32> to vector<8x128xf32>
    %15 = arith.addf %12, %14 : vector<8x128xf32>
    %16 = vector.extract_strided_slice %15 {offsets = [0, 0], sizes = [8, 32], strides = [1, 1]} : vector<8x128xf32> to vector<8x32xf32>
    %17 = vector.extract_strided_slice %15 {offsets = [0, 32], sizes = [8, 32], strides = [1, 1]} : vector<8x128xf32> to vector<8x32xf32>
    %18 = vector.extract_strided_slice %15 {offsets = [0, 64], sizes = [8, 32], strides = [1, 1]} : vector<8x128xf32> to vector<8x32xf32>
    %19 = vector.extract_strided_slice %15 {offsets = [0, 96], sizes = [8, 32], strides = [1, 1]} : vector<8x128xf32> to vector<8x32xf32>
    %cst_9 = arith.constant 0.000000e+00 : f32
    %20 = vector.broadcast %cst_9 : f32 to vector<8x32xf32>
    %21 = arith.minimumf %17, %20 : vector<8x32xf32>
    %22 = math.absf %17 : vector<8x32xf32>
    %cst_10 = arith.constant 0.000000e+00 : f32
    %23 = vector.broadcast %cst_10 : f32 to vector<8x32xf32>
    %24 = arith.subf %23, %22 : vector<8x32xf32>
    %25 = math.exp %24 : vector<8x32xf32>
    %26 = math.log1p %25 : vector<8x32xf32>
    %27 = arith.subf %21, %26 : vector<8x32xf32>
    %28 = arith.addf %27, %7 : vector<8x32xf32>
    %29 = arith.maximumf %28, %16 : vector<8x32xf32>
    %30 = arith.subf %16, %29 : vector<8x32xf32>
    %31 = math.exp %30 : vector<8x32xf32>
    %32 = arith.addf %27, %7 : vector<8x32xf32>
    %33 = arith.subf %32, %29 : vector<8x32xf32>
    %34 = math.exp %33 : vector<8x32xf32>
    %35 = arith.mulf %34, %5 : vector<8x32xf32>
    %36 = math.tanh %19 : vector<8x32xf32>
    %37 = arith.mulf %31, %36 : vector<8x32xf32>
    %38 = arith.addf %35, %37 : vector<8x32xf32>
    %39 = arith.mulf %34, %6 : vector<8x32xf32>
    %40 = arith.addf %39, %31 : vector<8x32xf32>
    %41 = arith.divf %38, %40 : vector<8x32xf32>
    %42 = arith.negf %18 : vector<8x32xf32>
    %43 = math.exp %42 : vector<8x32xf32>
    %cst_11 = arith.constant 1.000000e+00 : f32
    %44 = vector.broadcast %cst_11 : f32 to vector<8x32xf32>
    %45 = arith.addf %44, %43 : vector<8x32xf32>
    %46 = arith.divf %44, %45 : vector<8x32xf32>
    %47 = math.tanh %41 : vector<8x32xf32>
    %48 = arith.mulf %46, %47 : vector<8x32xf32>
    %49 = tpu.concatenate %48, %38, %40, %29 in 1 : vector<8x32xf32>, vector<8x32xf32>, vector<8x32xf32>, vector<8x32xf32> -> vector<8x128xf32>
    %c0_12 = arith.constant 0 : index
    %c0_13 = arith.constant 0 : index
    %50 = vector.load %arg6[%c0_12, %c0_13] : memref<8x128xf32, #tpu.memory_space<vmem>>, vector<8x128xf32>
    tpu.vector_store %arg6[%c0_12, %c0_13], %49 {strides = array<i32>} : memref<8x128xf32, #tpu.memory_space<vmem>>, vector<8x128xf32>,
    %c0_14 = arith.constant 0 : index
    %c0_15 = arith.constant 0 : index
    %c0_16 = arith.constant 0 : index
    %51 = vector.load %arg5[%c0_14, %c0_15, %c0_16] : memref<1x8x128xf32, #tpu.memory_space<vmem>>, vector<1x8x128xf32>
    %52 = vector.shape_cast %51 : vector<1x8x128xf32> to vector<8x128xf32>
    %53 = vector.shape_cast %49 : vector<8x128xf32> to vector<1x8x128xf32>
    tpu.vector_store %arg5[%c0_14, %c0_15, %c0_16], %53 {strides = array<i32>} : memref<1x8x128xf32, #tpu.memory_space<vmem>>, vector<1x8x128xf32>,
    return
  }
  func.func @transform_0(%arg0: i32) -> (i32, i32, i32) {
    %c0_i32 = arith.constant 0 : i32
    %c0_i32_0 = arith.constant 0 : i32
    %c0_i32_1 = arith.constant 0 : i32
    return %arg0, %c0_i32, %c0_i32_0 : i32, i32, i32
  }
  func.func @transform_1(%arg0: i32) -> (i32, i32) {
    %c0_i32 = arith.constant 0 : i32
    %c0_i32_0 = arith.constant 0 : i32
    %c0_i32_1 = arith.constant 0 : i32
    return %c0_i32, %c0_i32_0 : i32, i32
  }
  func.func @transform_2(%arg0: i32) -> (i32, i32) {
    %c0_i32 = arith.constant 0 : i32
    %c0_i32_0 = arith.constant 0 : i32
    %c0_i32_1 = arith.constant 0 : i32
    return %c0_i32, %c0_i32_0 : i32, i32
  }
  func.func @transform_3(%arg0: i32) -> (i32, i32) {
    %c0_i32 = arith.constant 0 : i32
    %c0_i32_0 = arith.constant 0 : i32
    %c0_i32_1 = arith.constant 0 : i32
    return %c0_i32, %c0_i32_0 : i32, i32
  }
  func.func @transform_4(%arg0: i32) -> (i32, i32, i32) {
    %c0_i32 = arith.constant 0 : i32
    %c0_i32_0 = arith.constant 0 : i32
    %c0_i32_1 = arith.constant 0 : i32
    return %arg0, %c0_i32, %c0_i32_0 : i32, i32, i32
  }
}

</mosaic_0001>

<llo_original>
// kernel: tpu_custom_call.1
$region0: #{tpu_custom_call.1}
  #allocation0 [shape = 'u32[]', space=smem, size = 0x4, offset = 0x4, fixed_abs, tag = 'smem constant byte address 0x4 - core index']
  #allocation1 [shape = 'u32[144,128]{1,0:T(1,128)}', space=vmem, size = 0x12000, scoped, tag = 'internal scratch']
  #allocation2 [shape = 'f32[8,128]{1,0:T(8,128)}', space=vmem, size = 0x1000, scoped, tag = 'scratch operand']
  %s0 = inlined_call_operand.hbm [shape: f32[8,8,16], index: 0, kind: input, shape index: {}]
  %s1 = inlined_call_operand.hbm [shape: f32[48,128], index: 1, kind: input, shape index: {}]
  %s2 = inlined_call_operand.vmem [shape: f32[1,128], index: 2, kind: input, shape index: {}]
  %s3 = inlined_call_operand.vmem [shape: f32[8,128], index: 3, kind: input, shape index: {}]
  %s4 = inlined_call_operand.hbm [shape: f32[8,8,128], index: 4, kind: output, shape index: {}]
  %s5 = sld [smem:[#allocation0]]
  $region61: #{tpu_custom_call.1} parent=0
    _
  %s7 = ssub.s32 1, %s5
  %s8 = scalar_select 0, %s7, %s5
  $region1: #{tpu_custom_call.1} parent=0
    #allocation3 [shape = 'u8[8192]{0}', space=vmem, size = 0x2000, scoped, tag = 'input window, operand 0']
    #allocation4 [shape = 's32[2]{0}', space=sflag, size = 0x8, scoped, tag = 'scoped memory for tpu_custom_call.1']
    #allocation5 [shape = 's32[2]{0}', space=sflag, size = 0x8, scoped, tag = 'scoped memory for tpu_custom_call.1']
    #allocation6 [shape = 'u8[24576]{0}', space=vmem, size = 0x6000, scoped, tag = 'input window, operand 1, single buffered']
    #allocation7 [shape = 's32[1]{0}', space=sflag, size = 0x4, scoped, tag = 'scoped memory for tpu_custom_call.1']
    #allocation8 [shape = 'u8[8192]{0}', space=vmem, size = 0x2000, scoped, tag = 'output window, operand 0']
    %9 = vsyncpa [#allocation4], 0
    %s10 = scalar_lea.sflag [#allocation4], 1
    %11 = vsyncpa %s10, 0
    %12 = vsyncpa [#allocation7], 0
    %13 = vsyncpa [#allocation5], 0
    %s14 = scalar_lea.sflag [#allocation5], 1
    %15 = vsyncpa %s14, 0
    loop: start=0, step=1, limit=10
    $region2: #{tpu_custom_call.1} parent=1 // loop_pre_header
      _
    $region3: #{tpu_custom_call.1} parent=1 // loop_header
      %s17 = sphi 0, %s21
      %p18 = scmp.ge.s32.totalorder %s17, 10
      %s27 = sphi 0, %s29
      %s30 = sphi 0, %s27
      %s31 = sphi 0, %s30
      %s47 = sphi 0, %s31
      %s51 = sphi 0, %s51
      %s53 = sphi 0, %s51
      %s54 = sphi 0, %s53
      %s68 = sphi 0, %s54
      %s72 = sphi 0, %s72
      %s74 = sphi 0, %s72
      %s75 = sphi 0, %s74
      %s89 = sphi 0, %s75
      %s93 = sphi 0, %s93
      %s95 = sphi 0, %s93
      %s96 = sphi 0, %s95
      %s110 = sphi 0, %s96
      %s116 = sphi 0, %s118
      %s119 = sphi 0, %s116
      %s120 = sphi 0, %s119
      %s136 = sphi 0, %s120
    $region4: #{tpu_custom_call.1} parent=1 // loop_header_branch
      %20 = sbr.rel (%p18) target = $region8
    $region5: #{tpu_custom_call.1} parent=1 // loop_body
      %s22 = ssub.s32 %s17, 1
      %s23 = ssub.s32 %s17, 2
      %s24 = sadd.s32 %s17, 1
      %s25 = ssub.s32 %s17, %s24
      %p26 = scmp.eq.s32.totalorder %s25, 0
      %s28 = sadd.s32 %s27, 1
      %s29 = scalar_select %p26, %s27, %s28
      %p32 = pneg %p26
      %p33 = scmp.eq.s32.totalorder %s17, 7
      %p34 = por %p32, %p33
      %p35 = scmp.ne.s32.totalorder %s27, %s30
      %p36 = scmp.eq.s32.totalorder %s17, 0
      %p37 = por %p35, %p36
      %p38 = scmp.ne.s32.totalorder %s27, %s30
      %p39 = scmp.eq.s32.totalorder %s22, 7
      %p40 = por %p38, %p39
      %p41 = scmp.ne.s32.totalorder %s30, %s31
      %p42 = scmp.eq.s32.totalorder %s22, 0
      %p43 = por %p41, %p42
      %p44 = scmp.ne.s32.totalorder %s30, %s31
      %p45 = scmp.eq.s32.totalorder %s23, 7
      %p46 = por %p44, %p45
      %p48 = scmp.ne.s32.totalorder %s31, %s47
      %p49 = scmp.eq.s32.totalorder %s23, 0
      %p50 = por %p48, %p49
      %s52 = sadd.s32 %s51, 1
      %p55 = scmp.eq.s32.totalorder %s17, 7
      %p56 = scmp.ne.s32.totalorder %s51, %s53
      %p57 = scmp.eq.s32.totalorder %s17, 0
      %p58 = por %p56, %p57
      %p59 = scmp.ne.s32.totalorder %s51, %s53
      %p60 = scmp.eq.s32.totalorder %s22, 7
      %p61 = por %p59, %p60
      %p62 = scmp.ne.s32.totalorder %s53, %s54
      %p63 = scmp.eq.s32.totalorder %s22, 0
      %p64 = por %p62, %p63
      %p65 = scmp.ne.s32.totalorder %s53, %s54
      %p66 = scmp.eq.s32.totalorder %s23, 7
      %p67 = por %p65, %p66
      %p69 = scmp.ne.s32.totalorder %s54, %s68
      %p70 = scmp.eq.s32.totalorder %s23, 0
      %p71 = por %p69, %p70
      %s73 = sadd.s32 %s72, 1
      %p76 = scmp.eq.s32.totalorder %s17, 7
      %p77 = scmp.ne.s32.totalorder %s72, %s74
      %p78 = scmp.eq.s32.totalorder %s17, 0
      %p79 = por %p77, %p78
      %p80 = scmp.ne.s32.totalorder %s72, %s74
      %p81 = scmp.eq.s32.totalorder %s22, 7
      %p82 = por %p80, %p81
      %p83 = scmp.ne.s32.totalorder %s74, %s75
      %p84 = scmp.eq.s32.totalorder %s22, 0
      %p85 = por %p83, %p84
      %p86 = scmp.ne.s32.totalorder %s74, %s75
      %p87 = scmp.eq.s32.totalorder %s23, 7
      %p88 = por %p86, %p87
      %p90 = scmp.ne.s32.totalorder %s75, %s89
      %p91 = scmp.eq.s32.totalorder %s23, 0
      %p92 = por %p90, %p91
      %s94 = sadd.s32 %s93, 1
      %p97 = scmp.eq.s32.totalorder %s17, 7
      %p98 = scmp.ne.s32.totalorder %s93, %s95
      %p99 = scmp.eq.s32.totalorder %s17, 0
      %p100 = por %p98, %p99
      %p101 = scmp.ne.s32.totalorder %s93, %s95
      %p102 = scmp.eq.s32.totalorder %s22, 7
      %p103 = por %p101, %p102
      %p104 = scmp.ne.s32.totalorder %s95, %s96
      %p105 = scmp.eq.s32.totalorder %s22, 0
      %p106 = por %p104, %p105
      %p107 = scmp.ne.s32.totalorder %s95, %s96
      %p108 = scmp.eq.s32.totalorder %s23, 7
      %p109 = por %p107, %p108
      %p111 = scmp.ne.s32.totalorder %s96, %s110
      %p112 = scmp.eq.s32.totalorder %s23, 0
      %p113 = por %p111, %p112
      %s114 = ssub.s32 %s17, %s24
      %p115 = scmp.eq.s32.totalorder %s114, 0
      %s117 = sadd.s32 %s116, 1
      %s118 = scalar_select %p115, %s116, %s117
      %p121 = pneg %p115
      %p122 = scmp.eq.s32.totalorder %s17, 7
      %p123 = por %p121, %p122
      %p124 = scmp.ne.s32.totalorder %s116, %s119
      %p125 = scmp.eq.s32.totalorder %s17, 0
      %p126 = por %p124, %p125
      %p127 = scmp.ne.s32.totalorder %s116, %s119
      %p128 = scmp.eq.s32.totalorder %s22, 7
      %p129 = por %p127, %p128
      %p130 = scmp.ne.s32.totalorder %s119, %s120
      %p131 = scmp.eq.s32.totalorder %s22, 0
      %p132 = por %p130, %p131
      %p133 = scmp.ne.s32.totalorder %s119, %s120
      %p134 = scmp.eq.s32.totalorder %s23, 7
      %p135 = por %p133, %p134
      %p137 = scmp.ne.s32.totalorder %s120, %s136
      %p138 = scmp.eq.s32.totalorder %s23, 0
      %p139 = por %p137, %p138
      %p140 = scmp.le.s32.totalorder 1, %s17
      %p141 = scmp.lt.s32.totalorder %s17, 9
      %p142 = pnand %p140, %p141
      %p143 = pneg %p142
      // Predicated region
      $region9: #{tpu_custom_call.1} parent=5 // pred_check
        _
      $region10: #{tpu_custom_call.1} parent=5 // pred_check_branch
        %145 = sbr.rel (%p142) target = $region12
      $region11: #{tpu_custom_call.1} parent=5 // pred_region
        %s146 = ssub.s32 %s17, 1
        // Predicated region
        $region13: #{tpu_custom_call.1} parent=11 // pred_check
          %p147 = pneg %p64
        $region14: #{tpu_custom_call.1} parent=11 // pred_check_branch
          %149 = sbr.rel (%p147) target = $region16
        $region15: #{tpu_custom_call.1} parent=11 // pred_region
          %s151 = ssub.s32 768, 768
          %152 = vsyncadd [#allocation7], %s151
          %s153 = sshll.u32 [#allocation6], 4
          %s154 = int_to_ptr.vmem [resolvable:$true] %s153
          %159 = dma.hbm_to_vmem [thread:$0]  %s1, 768, %s154, [#allocation7], 128, 128, 8
        $region16: #{tpu_custom_call.1} parent=11 // pred_fallthru
          _
        // Predicated region
        $region17: #{tpu_custom_call.1} parent=11 // pred_check
          %p160 = pneg %p85
        $region18: #{tpu_custom_call.1} parent=11 // pred_check_branch
          %162 = sbr.rel (%p160) target = $region20
        $region19: #{tpu_custom_call.1} parent=11 // pred_region
          _
        $region20: #{tpu_custom_call.1} parent=11 // pred_fallthru
          _
        // Predicated region
        $region21: #{tpu_custom_call.1} parent=11 // pred_check
          %p163 = pneg %p106
        $region22: #{tpu_custom_call.1} parent=11 // pred_check_branch
          %165 = sbr.rel (%p163) target = $region24
        $region23: #{tpu_custom_call.1} parent=11 // pred_region
          _
        $region24: #{tpu_custom_call.1} parent=11 // pred_fallthru
          _
      $region12: #{tpu_custom_call.1} parent=5 // pred_fallthru
        _
      %p166 = scmp.lt.s32.totalorder %s17, 8
      // Predicated region
      $region25: #{tpu_custom_call.1} parent=5 // pred_check
        %p167 = pneg %p166
      $region26: #{tpu_custom_call.1} parent=5 // pred_check_branch
        %169 = sbr.rel (%p167) target = $region28
      $region27: #{tpu_custom_call.1} parent=5 // pred_region
        // Predicated region
        $region29: #{tpu_custom_call.1} parent=27 // pred_check
          %p170 = pneg %p37
        $region30: #{tpu_custom_call.1} parent=27 // pred_check_branch
          %172 = sbr.rel (%p170) target = $region32
        $region31: #{tpu_custom_call.1} parent=27 // pred_region
          %s173 = sand.u32 %s27, 1
          %s174 = scalar_lea.sflag [#allocation4], %s173
          %s175 = sand.u32 %s27, 1
          %s176 = smul.addr %s175, 8
          %s177 = scalar_lea.vmem [#allocation3], %s176
          %s179 = ssub.s32 128, 128
          %180 = vsyncadd %s174, %s179
          %s181 = smul.addr %s17, 128
          %s182 = scalar_lea.hbm %s0, %s181
          %s184 = sshll.u32 %s177, 4
          %s185 = int_to_ptr.vmem [resolvable:$true] %s184
          %187 = dma.hbm_to_vmem [thread:$0]  %s182, 128, %s185, %s174
        $region32: #{tpu_custom_call.1} parent=27 // pred_fallthru
          _
      $region28: #{tpu_custom_call.1} parent=5 // pred_fallthru
        _
      %p188 = scmp.le.s32.totalorder 1, %s17
      %p189 = scmp.lt.s32.totalorder %s17, 9
      %p190 = pnand %p188, %p189
      %p191 = pneg %p190
      // Predicated region
      $region33: #{tpu_custom_call.1} parent=5 // pred_check
        _
      $region34: #{tpu_custom_call.1} parent=5 // pred_check_branch
        %193 = sbr.rel (%p190) target = $region36
      $region35: #{tpu_custom_call.1} parent=5 // pred_region
        %s194 = ssub.s32 %s17, 1
        %s195 = sand.u32 %s30, 1
        %s196 = scalar_lea.sflag [#allocation4], %s195
        %s197 = sand.u32 %s30, 1
        %s198 = smul.addr %s197, 8
        %s199 = scalar_lea.vmem [#allocation3], %s198
        // Predicated region
        $region37: #{tpu_custom_call.1} parent=35 // pred_check
          %p200 = pneg %p43
        $region38: #{tpu_custom_call.1} parent=35 // pred_check_branch
          %202 = sbr.rel (%p200) target = $region40
        $region39: #{tpu_custom_call.1} parent=35 // pred_region
          %203 = dma.done %s196, 128
        $region40: #{tpu_custom_call.1} parent=35 // pred_fallthru
          _
        // Predicated region
        $region41: #{tpu_custom_call.1} parent=35 // pred_check
          %p204 = pneg %p64
        $region42: #{tpu_custom_call.1} parent=35 // pred_check_branch
          %206 = sbr.rel (%p204) target = $region44
        $region43: #{tpu_custom_call.1} parent=35 // pred_region
          %207 = dma.done [#allocation7], 768
        $region44: #{tpu_custom_call.1} parent=35 // pred_fallthru
          _
        %s208 = sand.u32 %s30, 1
        %s209 = scalar_lea.sflag [#allocation4], %s208
        %s210 = sand.u32 %s30, 1
        %s211 = smul.addr %s210, 8
        %s212 = scalar_lea.vmem [#allocation3], %s211
        %p213 = pneg %p43
        %p214 = pneg %p40
        %p215 = pneg %p64
        %p216 = pneg %p61
        %p217 = pneg %p85
        %p218 = pneg %p82
        %p219 = pneg %p106
        %p220 = pneg %p103
        %p221 = pneg %p132
        %p222 = pneg %p129
        %s223 = sand.u32 %s119, 1
        %s224 = scalar_lea.sflag [#allocation5], %s223
        %s225 = sand.u32 %s119, 1
        %s226 = smul.addr %s225, 8
        %s227 = scalar_lea.vmem [#allocation8], %s226
        %p228 = scmp.eq.s32.totalorder %s22, 0
        // Predicated region
        $region45: #{tpu_custom_call.1} parent=35 // pred_check
          %p229 = pneg %p228
        $region46: #{tpu_custom_call.1} parent=35 // pred_check_branch
          %231 = sbr.rel (%p229) target = $region48
        $region47: #{tpu_custom_call.1} parent=35 // pred_region
          %v232 = vld [vmem:[%s3] sm:$0xff]
          %233 = vst [vmem:[#allocation2] sm:$0xff] %v232
        $region48: #{tpu_custom_call.1} parent=35 // pred_fallthru
          _
        %v234 = vld [vmem:[#allocation2] sm:$0xff]
        %v235 = vld [vmem:[%s199] sm:$0xff]
        %237 = vrot.lane.b32.xlu0 %v234, 16
        %v238 = vpop.permute.xlu0 %237
        %vm240 = vcmask 130048
        %v241 = vsel %vm240, %v235, %v238
        %v242 = vld [vmem:[#allocation6] sm:$0xff]
        %v243 = vld [vmem:[#allocation6 + $0x8] sm:$0xff]
        %v244 = vld [vmem:[#allocation6 + $0x10] sm:$0xff]
        %v245 = vld [vmem:[#allocation6 + $0x18] sm:$0xff]
        %v246 = vld [vmem:[#allocation6 + $0x20] sm:$0xff]
        %v247 = vld [vmem:[#allocation6 + $0x28] sm:$0xff]
        %v248 = vld [vmem:[%s2] sm:$0x1]
        %v250 = vlaneseq
        %v251 = vshrl.u32 %v250, 7
        %v252 = vsub.s32 0, %v251
        %v253 = vrot.slane %v248, %v252
        %vm255 = vcmask 392192
        %v257 = vsel %vm255, %v241, 0
        %259 = vmatprep.subr.mxu0 0.0
        %260 = vmatpush1.msra.mxu0 %v242
        %261 = vmatprep.subr.mxu0 0.0
        %262 = vmatpush1.msra.mxu0 %v243
        %263 = vmatprep.subr.mxu0 0.0
        %264 = vmatpush1.msra.mxu0 %v244
        %265 = vmatprep.subr.mxu0 0.0
        %266 = vmatpush1.msra.mxu0 %v245
        %267 = vmatprep.subr.mxu0 0.0
        %268 = vmatpush1.msra.mxu0 %v246
        %269 = vmatprep.subr.mxu0 0.0
        %270 = vmatpush1.msra.mxu0 %v247
        %271 = vmatprep.subr.mxu0 0.0
        %272 = vmatpush1.msra.mxu0 0.0
        %273 = vmatprep.subr.mxu0 0.0
        %274 = vmatpush1.msra.mxu0 0.0
        %275 = vmatprep.subr.mxu0 0.0
        %276 = vmatpush1.msra.mxu0 0.0
        %277 = vmatprep.subr.mxu0 0.0
        %278 = vmatpush1.msra.mxu0 0.0
        %279 = vmatprep.subr.mxu0 0.0
        %280 = vmatpush1.msra.mxu0 0.0
        %281 = vmatprep.subr.mxu0 0.0
        %282 = vmatpush1.msra.mxu0 0.0
        %283 = vmatprep.subr.mxu0 0.0
        %284 = vmatpush1.msra.mxu0 0.0
        %285 = vmatprep.subr.mxu0 0.0
        %286 = vmatpush1.msra.mxu0 0.0
        %287 = vmatprep.subr.mxu0 0.0
        %288 = vmatpush1.msra.mxu0 0.0
        %289 = vmatprep.subr.mxu0 0.0
        %290 = vmatpush1.msra.mxu0 0.0
        %291 = vmatprep.subr.mxu0 0.0
        %292 = vmatpush1.msra.mxu0 0.0
        %293 = vmatprep.subr.mxu0 0.0
        %294 = vmatpush1.msra.mxu0 0.0
        %295 = vmatprep.subr.mxu0 0.0
        %296 = vmatpush1.msra.mxu0 0.0
        %297 = vmatprep.subr.mxu0 0.0
        %298 = vmatpush1.msra.mxu0 0.0
        %299 = vmatprep.subr.mxu0 0.0
        %300 = vmatpush1.msra.mxu0 0.0
        %301 = vmatprep.subr.mxu0 0.0
        %302 = vmatpush1.msra.mxu0 0.0
        %303 = vmatprep.subr.mxu0 0.0
        %304 = vmatpush1.msra.mxu0 0.0
        %305 = vmatprep.subr.mxu0 0.0
        %306 = vmatpush1.msra.mxu0 0.0
        %307 = vmatprep.subr.mxu0 0.0
        %308 = vmatpush1.msra.mxu0 0.0
        %309 = vmatprep.subr.mxu0 0.0
        %310 = vmatpush1.msra.mxu0 0.0
        %311 = vmatprep.subr.mxu0 0.0
        %312 = vmatpush1.msra.mxu0 0.0
        %313 = vmatprep.subr.mxu0 0.0
        %314 = vmatpush1.msra.mxu0 0.0
        %315 = vmatprep.subr.mxu0 0.0
        %316 = vmatpush1.msra.mxu0 0.0
        %317 = vmatprep.subr.mxu0 0.0
        %318 = vmatpush1.msra.mxu0 0.0
        %319 = vmatprep.subr.mxu0 0.0
        %320 = vmatpush1.msra.mxu0 0.0
        %321 = vmatprep.subr.mxu0 0.0
        %322 = vmatpush1.msra.mxu0 0.0
        %323 = vmatprep.mubr.f32.mxu0 0.0
        %324 = vmatmul.mubr.f32.gmra.mrb[0].mxu0 %v257
        %v325 = vpop.f32.mrb[0].mxu0
        %v326 = vadd.f32 %v253, %v325
        %v327 = vpop.f32.mrb[0].mxu0
        %328 = vdwg.mxu0
        %v329 = vmin.f32 %v326, 0.0
        %v330 = vand.u32 2147483647, %v326
        %v331 = vsub.f32 0.0, %v330
        %v332 = vmul.f32 %v331, 1.442695
        %v333 = vpow.pop %v332
        %v334 = vadd.f32 %v333, 1.0
        %v335 = vlog2.pop %v334
        %v336 = vmul.f32 %v335, 0.6931472
        %v337 = vmul.f32 -0.5, %v333
        %v338 = vadd.f32 %v337, 1.0
        %v339 = vmul.f32 %v338, %v333
        %v340 = vand.u32 2147483647, %v333
        %vm341 = vcmp.lt.f32.partialorder %v340, 0.0004427343
        %v342 = vsel %vm341, %v339, %v336
        %v343 = vsub.f32 %v329, %v342
        %344 = vrot.lane.b32.xlu0 %v234, 64
        %v345 = vpop.permute.xlu0 %344
        %v347 = vadd.f32 %v343, %v345
        %349 = vrot.lane.b32.xlu0 %v326, 32
        %v350 = vpop.permute.xlu0 %349
        %v352 = vmax.f32 %v347, %v350
        %354 = vrot.lane.b32.xlu0 %v352, 96
        %v355 = vpop.permute.xlu0 %354
        %v357 = vsub.f32 %v326, %v355
        %v358 = vmul.f32 %v357, 1.442695
        %v359 = vpow.pop %v358
        %v360 = vsub.f32 %v347, %v352
        %v361 = vmul.f32 %v360, 1.442695
        %v362 = vpow.pop %v361
        %v363 = vmul.f32 %v362, %v234
        %v364 = vtanh.pop %v326
        %366 = vrot.lane.b32.xlu0 %v364, 32
        %v367 = vpop.permute.xlu0 %366
        %v369 = vmul.f32 %v359, %v367
        %371 = vrot.lane.b32.xlu0 %v369, 32
        %v372 = vpop.permute.xlu0 %371
        %v374 = vadd.f32 %v363, %v372
        %375 = vrot.lane.b32.xlu0 %v234, 96
        %v376 = vpop.permute.xlu0 %375
        %v378 = vmul.f32 %v362, %v376
        %380 = vrot.lane.b32.xlu0 %v359, 32
        %v381 = vpop.permute.xlu0 %380
        %v383 = vadd.f32 %v378, %v381
        %v384 = vrcp.pop %v383
        %v385 = vmul.f32 %v374, %v384
        %v386 = vxor.u32 %v326, 2147483648
        %v387 = vmul.f32 %v386, 1.442695
        %v388 = vpow.pop %v387
        %v389 = vadd.f32 %v388, 1.0
        %v390 = vrcp.pop %v389
        %v391 = vmul.f32 1.0, %v390
        %v392 = vtanh.pop %v385
        %394 = vrot.lane.b32.xlu0 %v392, 32
        %v395 = vpop.permute.xlu0 %394
        %v397 = vmul.f32 %v391, %v395
        %399 = vrot.lane.b32.xlu0 %v397, 64
        %v400 = vpop.permute.xlu0 %399
        %403 = vrot.lane.b32.xlu0 %v383, 32
        %v404 = vpop.permute.xlu0 %403
        %406 = vrot.lane.b32.xlu0 %v352, 64
        %v407 = vpop.permute.xlu0 %406
        %vm409 = vcmask 261120
        %v410 = vsel %vm409, %v400, %v374
        %vm411 = vcmask 523264
        %v412 = vsel %vm411, %v410, %v404
        %vm413 = vcmask 785408
        %v414 = vsel %vm413, %v412, %v407
        %415 = vst [vmem:[#allocation2] sm:$0xff] %v414
        %416 = vst [vmem:[%s227] sm:$0xff] %v414
        %s417 = sand.u32 %s119, 1
        %s418 = scalar_lea.sflag [#allocation5], %s417
        %s419 = sand.u32 %s119, 1
        %s420 = smul.addr %s419, 8
        %s421 = scalar_lea.vmem [#allocation8], %s420
        // Predicated region
        $region49: #{tpu_custom_call.1} parent=35 // pred_check
          %p422 = pneg %p129
        $region50: #{tpu_custom_call.1} parent=35 // pred_check_branch
          %424 = sbr.rel (%p422) target = $region52
        $region51: #{tpu_custom_call.1} parent=35 // pred_region
          %s426 = ssub.s32 128, 128
          %427 = vsyncadd %s418, %s426
          %s428 = smul.addr %s22, 128
          %s429 = scalar_lea.hbm %s4, %s428
          %s431 = sshll.u32 %s421, 4
          %s432 = int_to_ptr.vmem [resolvable:$true] %s431
          %434 = dma.vmem_to_hbm [thread:$0]  %s432, 128, %s429, %s418
        $region52: #{tpu_custom_call.1} parent=35 // pred_fallthru
          _
      $region36: #{tpu_custom_call.1} parent=5 // pred_fallthru
        _
      %p435 = scmp.le.s32.totalorder 2, %s17
      // Predicated region
      $region53: #{tpu_custom_call.1} parent=5 // pred_check
        %p436 = pneg %p435
      $region54: #{tpu_custom_call.1} parent=5 // pred_check_branch
        %438 = sbr.rel (%p436) target = $region56
      $region55: #{tpu_custom_call.1} parent=5 // pred_region
        %s439 = ssub.s32 %s17, 2
        // Predicated region
        $region57: #{tpu_custom_call.1} parent=55 // pred_check
          %p440 = pneg %p135
        $region58: #{tpu_custom_call.1} parent=55 // pred_check_branch
          %442 = sbr.rel (%p440) target = $region60
        $region59: #{tpu_custom_call.1} parent=55 // pred_region
          %s443 = sand.u32 %s120, 1
          %s444 = scalar_lea.sflag [#allocation5], %s443
          %s445 = sand.u32 %s120, 1
          %s446 = smul.addr %s445, 8
          %s447 = scalar_lea.vmem [#allocation8], %s446
          %448 = dma.done %s444, 128
        $region60: #{tpu_custom_call.1} parent=55 // pred_fallthru
          _
      $region56: #{tpu_custom_call.1} parent=5 // pred_fallthru
        _
    $region6: #{tpu_custom_call.1} parent=1 // loop_footer
      %s21 = sadd.s32 1, %s17
    $region7: #{tpu_custom_call.1} parent=1 // loop_footer_branch
      %16 = sbr.rel target = $region3
    $region8: #{tpu_custom_call.1} parent=1 // loop_exit
      _
    %449 = vsyncpa [#allocation4], 1
    %s450 = scalar_lea.sflag [#allocation4], 1
    %451 = vsyncpa %s450, 1
    %452 = vsyncpa [#allocation7], 1
    %453 = vsyncpa [#allocation5], 1
    %s454 = scalar_lea.sflag [#allocation5], 1
    %455 = vsyncpa %s454, 1

</llo_original>
